<compile_context>
chip_gen: v5e
topology: v5e:2x2
jax: 0.10.0
libtpu: 0.0.40
codegen_flags: <defaults>
</compile_context>

<pallas_src>
import functools

import jax
import jax.numpy as jnp
from jax.experimental import pallas as pl
from jax.experimental.pallas import tpu as pltpu

LEAKY_SLOPE = 0.01   # nn.LeakyReLU default negative_slope
BN_EPS = 1e-5        # nn.BatchNorm2d default eps


# --------------------------------------------------------------------------- #
# BN batch-statistics kernel (training mode): tiled one-pass sum / sumsq
# reduction over the shared bf16 padded layout -> per-channel scale / shift.
# --------------------------------------------------------------------------- #
def _bn_stats_kernel(xpad_ref, gamma_ref, beta_ref, scale_ref, shift_ref,
                     sum_ref, sq_ref, *, count):
    """xpad_ref: (1, C8, PADLEN) bf16.  gamma/beta/scale/shift/scratch: (C8,1) f32."""
    n = pl.program_id(0)

    @pl.when(n == 0)
    def _():
        sum_ref[...] = jnp.zeros_like(sum_ref)
        sq_ref[...] = jnp.zeros_like(sq_ref)

    x = xpad_ref[0].astype(jnp.float32)                       # (C8, PADLEN)
    sum_ref[...] += jnp.sum(x, axis=1, keepdims=True)
    sq_ref[...] += jnp.sum(x * x, axis=1, keepdims=True)

    @pl.when(n == pl.num_programs(0) - 1)
    def _():
        mean = sum_ref[...] / count
        var = jnp.maximum(sq_ref[...] / count - mean * mean, 0.0)   # biased var
        scale = gamma_ref[...] * jax.lax.rsqrt(var + BN_EPS)
        scale_ref[...] = scale
        shift_ref[...] = beta_ref[...] - mean * scale


def _bn_scale_shift(xpad, gamma_p, beta_p, *, count):
    """xpad: (N, C8, PADLEN) bf16 shared layout.  Padding zeros don't affect sums."""
    N, C8, PADLEN = xpad.shape
    kernel = functools.partial(_bn_stats_kernel, count=float(count))
    return pl.pallas_call(
        kernel,
        out_shape=(jax.ShapeDtypeStruct((C8, 1), jnp.float32),
                   jax.ShapeDtypeStruct((C8, 1), jnp.float32)),
        grid=(N,),
        in_specs=[
            pl.BlockSpec((1, C8, PADLEN), lambda n: (n, 0, 0)),
            pl.BlockSpec((C8, 1), lambda n: (0, 0)),
            pl.BlockSpec((C8, 1), lambda n: (0, 0)),
        ],
        out_specs=(pl.BlockSpec((C8, 1), lambda n: (0, 0)),
                   pl.BlockSpec((C8, 1), lambda n: (0, 0))),
        scratch_shapes=[pltpu.VMEM((C8, 1), jnp.float32),
                        pltpu.VMEM((C8, 1), jnp.float32)],
        compiler_params=pltpu.CompilerParams(
            dimension_semantics=("arbitrary",),
            vmem_limit_bytes=32 * 1024 * 1024),
    )(xpad, gamma_p, beta_p)


# --------------------------------------------------------------------------- #
# Fused (BN) + LeakyReLU + 3x3 conv kernel, B images per grid step,
# tap-accumulate GEMMs (no materialized im2col slab).
# --------------------------------------------------------------------------- #
def _ldecoder_conv_kernel(xpad_ref, scale_ref, shift_ref, mask_ref, w_ref,
                          bias_ref, o_ref, *, pw, hpw, b_img):
    """xpad_ref: (B, C8, (H+4)*PW) bf16   scale/shift: (C8, 1) f32
    mask: (1, (H+4)*PW) f32   w_ref: (9, Cout, C8) bf16   bias: (Cout, 1) f32
    o_ref: (B, Cout, H*PW) f32."""
    scale = scale_ref[...]
    shift = shift_ref[...]
    mask = mask_ref[...]
    bias = bias_ref[...]

    for b in range(b_img):                                    # static unroll
        x = xpad_ref[b].astype(jnp.float32)                   # (C8, PADLEN)
        # BN (identity scale/shift when disabled) + LeakyReLU, whole-block VPU.
        t = x * scale + shift
        t = jnp.where(t >= 0, t, LEAKY_SLOPE * t)
        # Re-zero the conv zero-padding cells (BN shift / LeakyReLU made them !=0),
        # then cast once to bf16 for the MXU.
        t = (t * mask).astype(jnp.bfloat16)                   # (C8, PADLEN)

        # Output flat index o = h*PW + w reads tap (dh, dw) at
        # o + (dh+1)*PW + dw - 1 = activation (h+dh-1, w+dw-1) or a zero pad cell.
        acc = None
        tap = 0
        for dh in range(3):
            for dw in range(3):
                off = (dh + 1) * pw + dw - 1
                p = jnp.dot(w_ref[tap], t[:, off:off + hpw],
                            preferred_element_type=jnp.float32)   # (Cout, H*PW)
                acc = p if acc is None else acc + p
                tap += 1
        o_ref[b] = acc + bias                                 # lane-dense store


def ldecoder_forward(x_nchw, gamma, beta, w_oihw, conv_bias, *, enable_bn=True):
    """Pallas implementation of LDecoderLayer.forward.  x_nchw: (N, Cin, H, W)."""
    N, Cin, H, W = x_nchw.shape
    Cout = w_oihw.shape[0]
    C8 = ((Cin + 7) // 8) * 8            # channels padded to a sublane group
    PW = ((W + 2 + 7) // 8) * 8          # padded row width (>= W+2)
    HPW = H * PW                         # flattened output row length (lanes)
    PADLEN = (H + 4) * PW                # covers all shifted reads

    # ---- shared bf16 padded layout (single activation copy, used by both) ----
    xpad = jnp.pad(x_nchw.astype(jnp.bfloat16),
                   ((0, 0), (0, C8 - Cin), (2, 2), (0, PW - W)))
    xpad = xpad.reshape(N, C8, PADLEN)

    g = jnp.pad(gamma.reshape(Cin, 1).astype(jnp.float32), ((0, C8 - Cin), (0, 0)))
    b_bn = jnp.pad(beta.reshape(Cin, 1).astype(jnp.float32), ((0, C8 - Cin), (0, 0)))

    # ---- BN scale / shift (tiled stats kernel; identity when disabled) -------
    if enable_bn:
        scale, shift = _bn_scale_shift(xpad, g, b_bn, count=N * H * W)   # (C8,1)
    else:
        scale = jnp.ones((C8, 1), jnp.float32)
        shift = jnp.zeros((C8, 1), jnp.float32)

    # Validity mask (1 on real pixels, 0 on padding cells).
    mask = jnp.zeros((H + 4, PW), jnp.float32).at[2:2 + H, :W].set(1.0)
    mask = mask.reshape(1, PADLEN)

    # Per-tap folded weights, pre-cast to bf16: (9, Cout, C8), tap = dh*3 + dw.
    wt = jnp.pad(w_oihw.astype(jnp.float32),
                 ((0, 0), (0, C8 - Cin), (0, 0), (0, 0)))      # (Cout, C8, 3, 3)
    w_taps = jnp.transpose(wt, (2, 3, 0, 1)).reshape(9, Cout, C8)
    w_taps = w_taps.astype(jnp.bfloat16)
    bias = conv_bias.reshape(Cout, 1).astype(jnp.float32)

    # Images per grid step: amortize per-step pipeline overhead, keep VMEM small.
    B = 1
    for cand in range(min(N, 8), 0, -1):
        if N % cand == 0:
            B = cand
            break

    kernel = functools.partial(_ldecoder_conv_kernel, pw=PW, hpw=HPW, b_img=B)
    out_wide = pl.pallas_call(
        kernel,
        out_shape=jax.ShapeDtypeStruct((N, Cout, HPW), jnp.float32),
        grid=(N // B,),
        in_specs=[
            pl.BlockSpec((B, C8, PADLEN), lambda n: (n, 0, 0)),
            pl.BlockSpec((C8, 1), lambda n: (0, 0)),
            pl.BlockSpec((C8, 1), lambda n: (0, 0)),
            pl.BlockSpec((1, PADLEN), lambda n: (0, 0)),
            pl.BlockSpec((9, Cout, C8), lambda n: (0, 0, 0)),
            pl.BlockSpec((Cout, 1), lambda n: (0, 0)),
        ],
        out_specs=pl.BlockSpec((B, Cout, HPW), lambda n: (n, 0, 0)),
        compiler_params=pltpu.CompilerParams(
            dimension_semantics=("parallel",),
            vmem_limit_bytes=32 * 1024 * 1024),
    )(xpad, scale, shift, mask, w_taps, bias)

    # Crop the PW padding columns; output is already NCHW (no transpose needed).
    return out_wide.reshape(N, Cout, H, PW)[:, :, :, :W]


# --------------------------------------------------------------------------- #
# Pure-JAX reference (PyTorch training-mode semantics) and self-test.
# --------------------------------------------------------------------------- #
def reference_forward(x, gamma, beta, w, b, *, enable_bn):
    y = x
    if enable_bn:
        mean = jnp.mean(y, axis=(0, 2, 3), keepdims=True)
        var = jnp.mean((y - mean) ** 2, axis=(0, 2, 3), keepdims=True)
        y = (y - mean) / jnp.sqrt(var + BN_EPS) * gamma.reshape(1, -1, 1, 1) \
            + beta.reshape(1, -1, 1, 1)
    y = jnp.where(y >= 0, y, LEAKY_SLOPE * y)
    out = jax.lax.conv_general_dilated(
        y, w, window_strides=(1, 1), padding=((1, 1), (1, 1)),
        dimension_numbers=("NCHW", "OIHW", "NCHW"),
        precision=jax.lax.Precision.HIGHEST)
    return out + b.reshape(1, -1, 1, 1)


if __name__ == "__main__":
    key = jax.random.PRNGKey(0)
    N, Cin, Cout, H, W = 2, 4, 8, 16, 16
    k1, k2, k3, k4, k5 = jax.random.split(key, 5)

    x = jax.random.normal(k1, (N, Cin, H, W), jnp.float32)
    # Deterministic synthetic parameters (shapes from LDecoderLayer.__init__).
    gamma = 1.0 + 0.1 * jax.random.normal(k2, (Cin,), jnp.float32)     # BN weight
    beta = 0.1 * jax.random.normal(k3, (Cin,), jnp.float32)            # BN bias
    w = jax.random.normal(k4, (Cout, Cin, 3, 3), jnp.float32) / ((Cin * 9) ** 0.5)
    b = 0.1 * jax.random.normal(k5, (Cout,), jnp.float32)              # conv bias

    for enable_bn in (True, False):
        out = ldecoder_forward(x, gamma, beta, w, b, enable_bn=enable_bn)
        out = jax.block_until_ready(out)
        ref = reference_forward(x, gamma, beta, w, b, enable_bn=enable_bn)
        assert out.shape == (N, Cout, H, W), out.shape
        # bf16 activation/weight DMA + bf16 MXU inputs (f32 accumulation)
        # -> bf16-level tolerance vs the f32 reference.
        assert jnp.allclose(out, ref, atol=5e-2, rtol=5e-2), (
            f"mismatch (enable_bn={enable_bn}): "
            f"max abs err = {float(jnp.max(jnp.abs(out - ref)))}")

    print("KERNEL_OK")
</pallas_src>

<mosaic_0001>
module attributes {stable_mosaic.version = 11 : i64} {
  func.func @_bn_stats_kernel(%arg0: i32, %arg1: memref<1x8x480xbf16, #tpu.memory_space<vmem>>, %arg2: memref<8x1xf32, #tpu.memory_space<vmem>>, %arg3: memref<8x1xf32, #tpu.memory_space<vmem>>, %arg4: memref<8x1xf32, #tpu.memory_space<vmem>>, %arg5: memref<8x1xf32, #tpu.memory_space<vmem>>, %arg6: memref<8x1xf32, #tpu.memory_space<vmem>>, %arg7: memref<8x1xf32, #tpu.memory_space<vmem>>) attributes {dimension_semantics = [#tpu.dimension_semantics<arbitrary>], iteration_bounds = array<i64: 2>, scalar_prefetch = 0 : i64, scratch_operands = 2 : i64, tpu.core_type = #tpu.core_type<tc>, window_params = [{transform_indices = @transform_0, window_bounds = array<i64: 1, 8, 480>}, {pipeline_mode = #tpu.pipeline_mode<synchronous>, transform_indices = @transform_1, window_bounds = array<i64: 8, 1>}, {pipeline_mode = #tpu.pipeline_mode<synchronous>, transform_indices = @transform_2, window_bounds = array<i64: 8, 1>}, {pipeline_mode = #tpu.pipeline_mode<synchronous>, transform_indices = @transform_3, window_bounds = array<i64: 8, 1>}, {pipeline_mode = #tpu.pipeline_mode<synchronous>, transform_indices = @transform_4, window_bounds = array<i64: 8, 1>}]} {
    %c0_i32 = arith.constant 0 : i32
    %0 = arith.cmpi eq, %arg0, %c0_i32 : i32
    %1 = arith.extui %0 : i1 to i32
    %c0_i32_0 = arith.constant 0 : i32
    %2 = arith.cmpi ne, %1, %c0_i32_0 : i32
    scf.if %2 {
      %cst_13 = arith.constant 0.000000e+00 : f32
      %20 = vector.broadcast %cst_13 : f32 to vector<8x1xf32>
      %c0_14 = arith.constant 0 : index
      %c0_15 = arith.constant 0 : index
      %21 = vector.load %arg6[%c0_14, %c0_15] : memref<8x1xf32, #tpu.memory_space<vmem>>, vector<8x1xf32>
      tpu.vector_store %arg6[%c0_14, %c0_15], %20 {strides = array<i32>} : memref<8x1xf32, #tpu.memory_space<vmem>>, vector<8x1xf32>,
      %cst_16 = arith.constant 0.000000e+00 : f32
      %22 = vector.broadcast %cst_16 : f32 to vector<8x1xf32>
      %c0_17 = arith.constant 0 : index
      %c0_18 = arith.constant 0 : index
      %23 = vector.load %arg7[%c0_17, %c0_18] : memref<8x1xf32, #tpu.memory_space<vmem>>, vector<8x1xf32>
      tpu.vector_store %arg7[%c0_17, %c0_18], %22 {strides = array<i32>} : memref<8x1xf32, #tpu.memory_space<vmem>>, vector<8x1xf32>,
    } else {
    }
    %c0 = arith.constant 0 : index
    %c0_1 = arith.constant 0 : index
    %c0_2 = arith.constant 0 : index
    %3 = vector.load %arg1[%c0, %c0_1, %c0_2] : memref<1x8x480xbf16, #tpu.memory_space<vmem>>, vector<1x8x480xbf16>
    %4 = vector.shape_cast %3 : vector<1x8x480xbf16> to vector<8x480xbf16>
    %5 = arith.extf %4 : vector<8x480xbf16> to vector<8x480xf32>
    %c0_3 = arith.constant 0 : index
    %c0_4 = arith.constant 0 : index
    %6 = vector.load %arg6[%c0_3, %c0_4] : memref<8x1xf32, #tpu.memory_space<vmem>>, vector<8x1xf32>
    %cst = arith.constant dense<0.000000e+00> : vector<8xf32>
    %7 = vector.multi_reduction <add>, %5, %cst [1] : vector<8x480xf32> to vector<8xf32>
    %8 = vector.shape_cast %7 : vector<8xf32> to vector<8x1xf32>
    %9 = arith.addf %6, %8 : vector<8x1xf32>
    %c0_5 = arith.constant 0 : index
    %c0_6 = arith.constant 0 : index
    %10 = vector.load %arg6[%c0_5, %c0_6] : memref<8x1xf32, #tpu.memory_space<vmem>>, vector<8x1xf32>
    tpu.vector_store %arg6[%c0_5, %c0_6], %9 {strides = array<i32>} : memref<8x1xf32, #tpu.memory_space<vmem>>, vector<8x1xf32>,
    %c0_7 = arith.constant 0 : index
    %c0_8 = arith.constant 0 : index
    %11 = vector.load %arg7[%c0_7, %c0_8] : memref<8x1xf32, #tpu.memory_space<vmem>>, vector<8x1xf32>
    %12 = arith.mulf %5, %5 : vector<8x480xf32>
    %cst_9 = arith.constant dense<0.000000e+00> : vector<8xf32>
    %13 = vector.multi_reduction <add>, %12, %cst_9 [1] : vector<8x480xf32> to vector<8xf32>
    %14 = vector.shape_cast %13 : vector<8xf32> to vector<8x1xf32>
    %15 = arith.addf %11, %14 : vector<8x1xf32>
    %c0_10 = arith.constant 0 : index
    %c0_11 = arith.constant 0 : index
    %16 = vector.load %arg7[%c0_10, %c0_11] : memref<8x1xf32, #tpu.memory_space<vmem>>, vector<8x1xf32>
    tpu.vector_store %arg7[%c0_10, %c0_11], %15 {strides = array<i32>} : memref<8x1xf32, #tpu.memory_space<vmem>>, vector<8x1xf32>,
    %c1_i32 = arith.constant 1 : i32
    %17 = arith.cmpi eq, %arg0, %c1_i32 : i32
    %18 = arith.extui %17 : i1 to i32
    %c0_i32_12 = arith.constant 0 : i32
    %19 = arith.cmpi ne, %18, %c0_i32_12 : i32
    scf.if %19 {
      %c0_13 = arith.constant 0 : index
      %c0_14 = arith.constant 0 : index
      %20 = vector.load %arg6[%c0_13, %c0_14] : memref<8x1xf32, #tpu.memory_space<vmem>>, vector<8x1xf32>
      %cst_15 = arith.constant 5.120000e+02 : f32
      %21 = vector.broadcast %cst_15 : f32 to vector<8x1xf32>
      %22 = arith.divf %20, %21 : vector<8x1xf32>
      %c0_16 = arith.constant 0 : index
      %c0_17 = arith.constant 0 : index
      %23 = vector.load %arg7[%c0_16, %c0_17] : memref<8x1xf32, #tpu.memory_space<vmem>>, vector<8x1xf32>
      %cst_18 = arith.constant 5.120000e+02 : f32
      %24 = vector.broadcast %cst_18 : f32 to vector<8x1xf32>
      %25 = arith.divf %23, %24 : vector<8x1xf32>
      %26 = arith.mulf %22, %22 : vector<8x1xf32>
      %27 = arith.subf %25, %26 : vector<8x1xf32>
      %cst_19 = arith.constant 0.000000e+00 : f32
      %28 = vector.broadcast %cst_19 : f32 to vector<8x1xf32>
      %29 = arith.maximumf %27, %28 : vector<8x1xf32>
      %c0_20 = arith.constant 0 : index
      %c0_21 = arith.constant 0 : index
      %30 = vector.load %arg2[%c0_20, %c0_21] : memref<8x1xf32, #tpu.memory_space<vmem>>, vector<8x1xf32>
      %cst_22 = arith.constant 9.99999974E-6 : f32
      %31 = vector.broadcast %cst_22 : f32 to vector<8x1xf32>
      %32 = arith.addf %29, %31 : vector<8x1xf32>
      %33 = math.rsqrt %32 : vector<8x1xf32>
      %34 = arith.mulf %30, %33 : vector<8x1xf32>
      %c0_23 = arith.constant 0 : index
      %c0_24 = arith.constant 0 : index
      %35 = vector.load %arg4[%c0_23, %c0_24] : memref<8x1xf32, #tpu.memory_space<vmem>>, vector<8x1xf32>
      tpu.vector_store %arg4[%c0_23, %c0_24], %34 {strides = array<i32>} : memref<8x1xf32, #tpu.memory_space<vmem>>, vector<8x1xf32>,
      %c0_25 = arith.constant 0 : index
      %c0_26 = arith.constant 0 : index
      %36 = vector.load %arg3[%c0_25, %c0_26] : memref<8x1xf32, #tpu.memory_space<vmem>>, vector<8x1xf32>
      %37 = arith.mulf %22, %34 : vector<8x1xf32>
      %38 = arith.subf %36, %37 : vector<8x1xf32>
      %c0_27 = arith.constant 0 : index
      %c0_28 = arith.constant 0 : index
      %39 = vector.load %arg5[%c0_27, %c0_28] : memref<8x1xf32, #tpu.memory_space<vmem>>, vector<8x1xf32>
      tpu.vector_store %arg5[%c0_27, %c0_28], %38 {strides = array<i32>} : memref<8x1xf32, #tpu.memory_space<vmem>>, vector<8x1xf32>,
    } else {
    }
    return
  }
  func.func @transform_0(%arg0: i32) -> (i32, i32, i32) {
    %c0_i32 = arith.constant 0 : i32
    %c0_i32_0 = arith.constant 0 : i32
    %c0_i32_1 = arith.constant 0 : i32
    return %arg0, %c0_i32, %c0_i32_0 : i32, i32, i32
  }
  func.func @transform_1(%arg0: i32) -> (i32, i32) {
    %c0_i32 = arith.constant 0 : i32
    %c0_i32_0 = arith.constant 0 : i32
    %c0_i32_1 = arith.constant 0 : i32
    return %c0_i32, %c0_i32_0 : i32, i32
  }
  func.func @transform_2(%arg0: i32) -> (i32, i32) {
    %c0_i32 = arith.constant 0 : i32
    %c0_i32_0 = arith.constant 0 : i32
    %c0_i32_1 = arith.constant 0 : i32
    return %c0_i32, %c0_i32_0 : i32, i32
  }
  func.func @transform_3(%arg0: i32) -> (i32, i32) {
    %c0_i32 = arith.constant 0 : i32
    %c0_i32_0 = arith.constant 0 : i32
    %c0_i32_1 = arith.constant 0 : i32
    return %c0_i32, %c0_i32_0 : i32, i32
  }
  func.func @transform_4(%arg0: i32) -> (i32, i32) {
    %c0_i32 = arith.constant 0 : i32
    %c0_i32_0 = arith.constant 0 : i32
    %c0_i32_1 = arith.constant 0 : i32
    return %c0_i32, %c0_i32_0 : i32, i32
  }
}

</mosaic_0001>

<llo_original>
// kernel: tpu_custom_call.1
$region0: #{tpu_custom_call.1}
  #allocation0 [shape = 'u32[]', space=smem, size = 0x4, offset = 0x4, fixed_abs, tag = 'smem constant byte address 0x4 - core index']
  #allocation1 [shape = 'u32[72,128]{1,0:T(1,128)}', space=vmem, size = 0x9000, scoped, tag = 'internal scratch']
  #allocation2 [shape = 'f32[8,1]{1,0:T(8,128)}', space=vmem, size = 0x1000, scoped, tag = 'scratch operand']
  #allocation3 [shape = 'f32[8,1]{1,0:T(8,128)}', space=vmem, size = 0x1000, scoped, tag = 'scratch operand']
  %s0 = inlined_call_operand.hbm [shape: bf16[2,8,480], index: 0, kind: input, shape index: {}]
  %s1 = inlined_call_operand.vmem [shape: f32[8,1], index: 1, kind: input, shape index: {}]
  %s2 = inlined_call_operand.vmem [shape: f32[8,1], index: 2, kind: input, shape index: {}]
  %s3 = inlined_call_operand.vmem [shape: f32[8,1], index: 3, kind: output, shape index: {0}]
  %s4 = inlined_call_operand.vmem [shape: f32[8,1], index: 4, kind: output, shape index: {1}]
  %5 = xla_tuple %s3, %s4
  %s6 = sld [smem:[#allocation0]]
  $region65: #{tpu_custom_call.1} parent=0
    _
  %s8 = ssub.s32 1, %s6
  %s9 = scalar_select 0, %s8, %s6
  $region1: #{tpu_custom_call.1} parent=0
    #allocation4 [shape = 'u8[16384]{0}', space=vmem, size = 0x4000, scoped, tag = 'input window, operand 0']
    #allocation5 [shape = 's32[2]{0}', space=sflag, size = 0x8, scoped, tag = 'scoped memory for tpu_custom_call.1']
    %10 = vsyncpa [#allocation5], 0
    %s11 = scalar_lea.sflag [#allocation5], 1
    %12 = vsyncpa %s11, 0
    loop: start=0, step=1, limit=4
    $region2: #{tpu_custom_call.1} parent=1 // loop_pre_header
      _
    $region3: #{tpu_custom_call.1} parent=1 // loop_header
      %s14 = sphi 0, %s18
      %p15 = scmp.ge.s32.totalorder %s14, 4
      %s24 = sphi 0, %s26
      %s27 = sphi 0, %s24
      %s28 = sphi 0, %s27
      %s44 = sphi 0, %s28
      %s48 = sphi 0, %s48
      %s50 = sphi 0, %s48
      %s51 = sphi 0, %s50
      %s65 = sphi 0, %s51
      %s69 = sphi 0, %s69
      %s71 = sphi 0, %s69
      %s72 = sphi 0, %s71
      %s86 = sphi 0, %s72
      %s90 = sphi 0, %s90
      %s92 = sphi 0, %s90
      %s93 = sphi 0, %s92
      %s107 = sphi 0, %s93
      %s111 = sphi 0, %s111
      %s113 = sphi 0, %s111
      %s114 = sphi 0, %s113
      %s128 = sphi 0, %s114
    $region4: #{tpu_custom_call.1} parent=1 // loop_header_branch
      %17 = sbr.rel (%p15) target = $region8
    $region5: #{tpu_custom_call.1} parent=1 // loop_body
      %s19 = ssub.s32 %s14, 1
      %s20 = ssub.s32 %s14, 2
      %s21 = sadd.s32 %s14, 1
      %s22 = ssub.s32 %s14, %s21
      %p23 = scmp.eq.s32.totalorder %s22, 0
      %s25 = sadd.s32 %s24, 1
      %s26 = scalar_select %p23, %s24, %s25
      %p29 = pneg %p23
      %p30 = scmp.eq.s32.totalorder %s14, 1
      %p31 = por %p29, %p30
      %p32 = scmp.ne.s32.totalorder %s24, %s27
      %p33 = scmp.eq.s32.totalorder %s14, 0
      %p34 = por %p32, %p33
      %p35 = scmp.ne.s32.totalorder %s24, %s27
      %p36 = scmp.eq.s32.totalorder %s19, 1
      %p37 = por %p35, %p36
      %p38 = scmp.ne.s32.totalorder %s27, %s28
      %p39 = scmp.eq.s32.totalorder %s19, 0
      %p40 = por %p38, %p39
      %p41 = scmp.ne.s32.totalorder %s27, %s28
      %p42 = scmp.eq.s32.totalorder %s20, 1
      %p43 = por %p41, %p42
      %p45 = scmp.ne.s32.totalorder %s28, %s44
      %p46 = scmp.eq.s32.totalorder %s20, 0
      %p47 = por %p45, %p46
      %s49 = sadd.s32 %s48, 1
      %p52 = scmp.eq.s32.totalorder %s14, 1
      %p53 = scmp.ne.s32.totalorder %s48, %s50
      %p54 = scmp.eq.s32.totalorder %s14, 0
      %p55 = por %p53, %p54
      %p56 = scmp.ne.s32.totalorder %s48, %s50
      %p57 = scmp.eq.s32.totalorder %s19, 1
      %p58 = por %p56, %p57
      %p59 = scmp.ne.s32.totalorder %s50, %s51
      %p60 = scmp.eq.s32.totalorder %s19, 0
      %p61 = por %p59, %p60
      %p62 = scmp.ne.s32.totalorder %s50, %s51
      %p63 = scmp.eq.s32.totalorder %s20, 1
      %p64 = por %p62, %p63
      %p66 = scmp.ne.s32.totalorder %s51, %s65
      %p67 = scmp.eq.s32.totalorder %s20, 0
      %p68 = por %p66, %p67
      %s70 = sadd.s32 %s69, 1
      %p73 = scmp.eq.s32.totalorder %s14, 1
      %p74 = scmp.ne.s32.totalorder %s69, %s71
      %p75 = scmp.eq.s32.totalorder %s14, 0
      %p76 = por %p74, %p75
      %p77 = scmp.ne.s32.totalorder %s69, %s71
      %p78 = scmp.eq.s32.totalorder %s19, 1
      %p79 = por %p77, %p78
      %p80 = scmp.ne.s32.totalorder %s71, %s72
      %p81 = scmp.eq.s32.totalorder %s19, 0
      %p82 = por %p80, %p81
      %p83 = scmp.ne.s32.totalorder %s71, %s72
      %p84 = scmp.eq.s32.totalorder %s20, 1
      %p85 = por %p83, %p84
      %p87 = scmp.ne.s32.totalorder %s72, %s86
      %p88 = scmp.eq.s32.totalorder %s20, 0
      %p89 = por %p87, %p88
      %s91 = sadd.s32 %s90, 1
      %p94 = scmp.eq.s32.totalorder %s14, 1
      %p95 = scmp.ne.s32.totalorder %s90, %s92
      %p96 = scmp.eq.s32.totalorder %s14, 0
      %p97 = por %p95, %p96
      %p98 = scmp.ne.s32.totalorder %s90, %s92
      %p99 = scmp.eq.s32.totalorder %s19, 1
      %p100 = por %p98, %p99
      %p101 = scmp.ne.s32.totalorder %s92, %s93
      %p102 = scmp.eq.s32.totalorder %s19, 0
      %p103 = por %p101, %p102
      %p104 = scmp.ne.s32.totalorder %s92, %s93
      %p105 = scmp.eq.s32.totalorder %s20, 1
      %p106 = por %p104, %p105
      %p108 = scmp.ne.s32.totalorder %s93, %s107
      %p109 = scmp.eq.s32.totalorder %s20, 0
      %p110 = por %p108, %p109
      %s112 = sadd.s32 %s111, 1
      %p115 = scmp.eq.s32.totalorder %s14, 1
      %p116 = scmp.ne.s32.totalorder %s111, %s113
      %p117 = scmp.eq.s32.totalorder %s14, 0
      %p118 = por %p116, %p117
      %p119 = scmp.ne.s32.totalorder %s111, %s113
      %p120 = scmp.eq.s32.totalorder %s19, 1
      %p121 = por %p119, %p120
      %p122 = scmp.ne.s32.totalorder %s113, %s114
      %p123 = scmp.eq.s32.totalorder %s19, 0
      %p124 = por %p122, %p123
      %p125 = scmp.ne.s32.totalorder %s113, %s114
      %p126 = scmp.eq.s32.totalorder %s20, 1
      %p127 = por %p125, %p126
      %p129 = scmp.ne.s32.totalorder %s114, %s128
      %p130 = scmp.eq.s32.totalorder %s20, 0
      %p131 = por %p129, %p130
      %p132 = scmp.le.s32.totalorder 1, %s14
      %p133 = scmp.lt.s32.totalorder %s14, 3
      %p134 = pnand %p132, %p133
      %p135 = pneg %p134
      // Predicated region
      $region9: #{tpu_custom_call.1} parent=5 // pred_check
        _
      $region10: #{tpu_custom_call.1} parent=5 // pred_check_branch
        %137 = sbr.rel (%p134) target = $region12
      $region11: #{tpu_custom_call.1} parent=5 // pred_region
        %s138 = ssub.s32 %s14, 1
        // Predicated region
        $region13: #{tpu_custom_call.1} parent=11 // pred_check
          %p139 = pneg %p61
        $region14: #{tpu_custom_call.1} parent=11 // pred_check_branch
          %141 = sbr.rel (%p139) target = $region16
        $region15: #{tpu_custom_call.1} parent=11 // pred_region
          _
        $region16: #{tpu_custom_call.1} parent=11 // pred_fallthru
          _
        // Predicated region
        $region17: #{tpu_custom_call.1} parent=11 // pred_check
          %p142 = pneg %p82
        $region18: #{tpu_custom_call.1} parent=11 // pred_check_branch
          %144 = sbr.rel (%p142) target = $region20
        $region19: #{tpu_custom_call.1} parent=11 // pred_region
          _
        $region20: #{tpu_custom_call.1} parent=11 // pred_fallthru
          _
      $region12: #{tpu_custom_call.1} parent=5 // pred_fallthru
        _
      %p145 = scmp.lt.s32.totalorder %s14, 2
      // Predicated region
      $region21: #{tpu_custom_call.1} parent=5 // pred_check
        %p146 = pneg %p145
      $region22: #{tpu_custom_call.1} parent=5 // pred_check_branch
        %148 = sbr.rel (%p146) target = $region24
      $region23: #{tpu_custom_call.1} parent=5 // pred_region
        // Predicated region
        $region25: #{tpu_custom_call.1} parent=23 // pred_check
          %p149 = pneg %p34
        $region26: #{tpu_custom_call.1} parent=23 // pred_check_branch
          %151 = sbr.rel (%p149) target = $region28
        $region27: #{tpu_custom_call.1} parent=23 // pred_region
          %s152 = sand.u32 %s24, 1
          %s153 = scalar_lea.sflag [#allocation5], %s152
          %s154 = sand.u32 %s24, 1
          %s155 = smul.addr %s154, 16
          %s156 = scalar_lea.vmem [#allocation4], %s155
          %158 = vsyncadd %s153, 0
          %s159 = smul.addr %s14, 4
          %s160 = smul.addr %s159, 4
          %s161 = scalar_lea.hbm %s0, %s160
          %s163 = sshll.u32 %s161, 4
          %s164 = int_to_ptr.hbm [resolvable:$true] %s163
          %s165 = sshll.u32 %s156, 4
          %s166 = int_to_ptr.vmem [resolvable:$true] %s165
          %168 = dma.hbm_to_vmem [thread:$0]  %s164, 256, %s166, %s153
        $region28: #{tpu_custom_call.1} parent=23 // pred_fallthru
          _
      $region24: #{tpu_custom_call.1} parent=5 // pred_fallthru
        _
      %p169 = scmp.le.s32.totalorder 1, %s14
      %p170 = scmp.lt.s32.totalorder %s14, 3
      %p171 = pnand %p169, %p170
      %p172 = pneg %p171
      // Predicated region
      $region29: #{tpu_custom_call.1} parent=5 // pred_check
        _
      $region30: #{tpu_custom_call.1} parent=5 // pred_check_branch
        %174 = sbr.rel (%p171) target = $region32
      $region31: #{tpu_custom_call.1} parent=5 // pred_region
        %s175 = ssub.s32 %s14, 1
        %s176 = sand.u32 %s27, 1
        %s177 = scalar_lea.sflag [#allocation5], %s176
        %s178 = sand.u32 %s27, 1
        %s179 = smul.addr %s178, 16
        %s180 = scalar_lea.vmem [#allocation4], %s179
        // Predicated region
        $region33: #{tpu_custom_call.1} parent=31 // pred_check
          %p181 = pneg %p40
        $region34: #{tpu_custom_call.1} parent=31 // pred_check_branch
          %183 = sbr.rel (%p181) target = $region36
        $region35: #{tpu_custom_call.1} parent=31 // pred_region
          %185 = dma.done %s177, 256
        $region36: #{tpu_custom_call.1} parent=31 // pred_fallthru
          _
        %s186 = sand.u32 %s27, 1
        %s187 = scalar_lea.sflag [#allocation5], %s186
        %s188 = sand.u32 %s27, 1
        %s189 = smul.addr %s188, 16
        %s190 = scalar_lea.vmem [#allocation4], %s189
        %p191 = pneg %p40
        %p192 = pneg %p37
        %p193 = pneg %p61
        %p194 = pneg %p58
        %p195 = pneg %p82
        %p196 = pneg %p79
        %p197 = pneg %p103
        %p198 = pneg %p100
        %p199 = pneg %p124
        %p200 = pneg %p121
        %p201 = scmp.eq.s32.totalorder %s19, 0
        // Predicated region
        $region37: #{tpu_custom_call.1} parent=31 // pred_check
          %p202 = pneg %p201
        $region38: #{tpu_custom_call.1} parent=31 // pred_check_branch
          %204 = sbr.rel (%p202) target = $region40
        $region39: #{tpu_custom_call.1} parent=31 // pred_region
          %vm205 = vcmask 7168
          %206 = vst.msk [vmem:[#allocation2] sm:$0xff] %vm205, 0.0
          %207 = vst.msk [vmem:[#allocation3] sm:$0xff] %vm205, 0.0
        $region40: #{tpu_custom_call.1} parent=31 // pred_fallthru
          _
        %v208 = vld [vmem:[%s180] sm:$0xff]
        %v209 = vld [vmem:[%s180 + $0x8] sm:$0xff]
        %v210 = vunpack.c.l.bf16 %v208
        %v211 = vunpack.c.h.bf16 %v208
        %v212 = vunpack.c.l.bf16 %v209
        %v213 = vunpack.c.h.bf16 %v209
        %v214 = vld [vmem:[#allocation2] sm:$0xff]
        %v215 = vadd.f32 %v210, %v211
        %v216 = vadd.f32 %v215, %v212
        %vm217 = vcmask 785408
        %v218 = vsel %vm217, %v213, 0.0
        %v219 = vadd.f32 %v216, %v218
        %220 = vadd.xlane.f32.xlu0 %v219
        %v221 = vpop.xlane.xlu0 %220
        %v222 = vadd.f32 %v214, %v221
        %vm223 = vcmask 7168
        %224 = vst.msk [vmem:[#allocation2] sm:$0xff] %vm223, %v222
        %v225 = vld [vmem:[#allocation3] sm:$0xff]
        %v226 = vmul.f32 %v210, %v210
        %v227 = vmul.f32 %v211, %v211
        %v228 = vmul.f32 %v212, %v212
        %v229 = vmul.f32 %v213, %v213
        %v230 = vadd.f32 %v226, %v227
        %v231 = vadd.f32 %v230, %v228
        %v232 = vsel %vm217, %v229, 0.0
        %v233 = vadd.f32 %v231, %v232
        %234 = vadd.xlane.f32.xlu0 %v233
        %v235 = vpop.xlane.xlu0 %234
        %v236 = vadd.f32 %v225, %v235
        %237 = vst.msk [vmem:[#allocation3] sm:$0xff] %vm223, %v236
        %p238 = scmp.eq.s32.totalorder %s19, 1
        // Predicated region
        $region41: #{tpu_custom_call.1} parent=31 // pred_check
          %p239 = pneg %p238
        $region42: #{tpu_custom_call.1} parent=31 // pred_check_branch
          %241 = sbr.rel (%p239) target = $region44
        $region43: #{tpu_custom_call.1} parent=31 // pred_region
          %v242 = vld [vmem:[#allocation2] sm:$0xff]
          %v243 = vrcp.pop 512.0
          %v244 = vmul.f32 512.0, %v243
          %v245 = vsub.f32 1.0, %v244
          %v246 = vmul.f32 %v243, %v245
          %v247 = vadd.f32 %v243, %v246
          %vm248 = vweird.f32 %v243
          %v249 = vsel %vm248, %v243, %v247
          %v250 = vmul.f32 %v242, %v249
          %v251 = vld [vmem:[#allocation3] sm:$0xff]
          %v252 = vmul.f32 %v251, %v249
          %v253 = vmul.f32 %v250, %v250
          %v254 = vsub.f32 %v252, %v253
          %v255 = vmax.f32 %v254, 0.0
          %v256 = vld [vmem:[%s1] sm:$0xff]
          %v257 = vadd.f32 %v255, 1e-05
          %v258 = vrsqrt.pop %v257
          %v259 = vmul.f32 %v258, %v257
          %v260 = vmul.f32 %v259, %v258
          %v261 = vmul.f32 0.5, %v260
          %v262 = vsub.f32 1.5, %v261
          %v263 = vmul.f32 %v258, %v262
          %vm264 = vweird.f32 %v257
          %vm265 = vweird.f32 %v258
          %vm266 = vmor %vm264, %vm265
          %v267 = vsel %vm266, %v258, %v263
          %v268 = vmul.f32 %v256, %v267
          %269 = vst.msk [vmem:[%s3] sm:$0xff] %vm223, %v268
          %v270 = vld [vmem:[%s2] sm:$0xff]
          %v271 = vmul.f32 %v250, %v268
          %v272 = vsub.f32 %v270, %v271
          %273 = vst.msk [vmem:[%s4] sm:$0xff] %vm223, %v272
        $region44: #{tpu_custom_call.1} parent=31 // pred_fallthru
          _
        // Predicated region
        $region45: #{tpu_custom_call.1} parent=31 // pred_check
          %p274 = pneg %p100
        $region46: #{tpu_custom_call.1} parent=31 // pred_check_branch
          %276 = sbr.rel (%p274) target = $region48
        $region47: #{tpu_custom_call.1} parent=31 // pred_region
          _
        $region48: #{tpu_custom_call.1} parent=31 // pred_fallthru
          _
        // Predicated region
        $region49: #{tpu_custom_call.1} parent=31 // pred_check
          %p277 = pneg %p121
        $region50: #{tpu_custom_call.1} parent=31 // pred_check_branch
          %279 = sbr.rel (%p277) target = $region52
        $region51: #{tpu_custom_call.1} parent=31 // pred_region
          _
        $region52: #{tpu_custom_call.1} parent=31 // pred_fallthru
          _
        // Predicated region
        $region53: #{tpu_custom_call.1} parent=31 // pred_check
          %p280 = pneg %p100
        $region54: #{tpu_custom_call.1} parent=31 // pred_check_branch
          %282 = sbr.rel (%p280) target = $region56
        $region55: #{tpu_custom_call.1} parent=31 // pred_region
          _
        $region56: #{tpu_custom_call.1} parent=31 // pred_fallthru
          _
        // Predicated region
        $region57: #{tpu_custom_call.1} parent=31 // pred_check
          %p283 = pneg %p121
        $region58: #{tpu_custom_call.1} parent=31 // pred_check_branch
          %285 = sbr.rel (%p283) target = $region60
        $region59: #{tpu_custom_call.1} parent=31 // pred_region
          _
        $region60: #{tpu_custom_call.1} parent=31 // pred_fallthru
          _
      $region32: #{tpu_custom_call.1} parent=5 // pred_fallthru
        _
      %p286 = scmp.le.s32.totalorder 2, %s14
      // Predicated region
      $region61: #{tpu_custom_call.1} parent=5 // pred_check
        %p287 = pneg %p286
      $region62: #{tpu_custom_call.1} parent=5 // pred_check_branch
        %289 = sbr.rel (%p287) target = $region64
      $region63: #{tpu_custom_call.1} parent=5 // pred_region
        %s290 = ssub.s32 %s14, 2
      $region64: #{tpu_custom_call.1} parent=5 // pred_fallthru
        _
    $region6: #{tpu_custom_call.1} parent=1 // loop_footer
      %s18 = sadd.s32 1, %s14
    $region7: #{tpu_custom_call.1} parent=1 // loop_footer_branch
      %13 = sbr.rel target = $region3
    $region8: #{tpu_custom_call.1} parent=1 // loop_exit
      _
    %291 = vsyncpa [#allocation5], 1
    %s292 = scalar_lea.sflag [#allocation5], 1
    %293 = vsyncpa %s292, 1

</llo_original>
